<compile_context>
chip_gen: v5e
topology: v5e:2x2
jax: 0.10.0
libtpu: 0.0.40
codegen_flags: <defaults>
</compile_context>

<pallas_src>
import functools

import jax
import jax.numpy as jnp
from jax.experimental import pallas as pl
from jax.experimental.pallas import tpu as pltpu

LANE = 128


def _round_up(x, m):
    return ((x + m - 1) // m) * m


def _vmem_capacity_bytes():
    """Per-TensorCore VMEM capacity; conservative fallback is v7x's 64 MiB."""
    try:
        info = pltpu.get_tpu_info()
        cap = getattr(info, "vmem_capacity_bytes", None)
        if cap:
            return int(cap)
    except Exception:
        pass
    return 64 << 20


def _choose_tiles(np_, f_in, f_out, vmem_budget):
    """Pick (tm, tk) A-tile dims: multiples of 128 dividing np_, within budget."""

    def best_divisor(cap):
        t, best = 128, 128
        while t <= min(np_, cap):
            if np_ % t == 0:
                best = t
            t += 128
        return best

    tm_cap, tk_cap = 512, 2048
    while True:
        tm = best_divisor(tm_cap)
        tk = best_divisor(tk_cap)
        need = (2 * tm * tk * 2          # double-buffered A tiles (bf16)
                + 2 * tk * f_in * 2      # double-buffered H tiles (bf16)
                + 2 * tm * f_out * 4     # double-buffered output tiles
                + tm * f_in * 4          # f32 accumulator scratch
                + f_in * f_out * 2 + f_out * 4)   # resident W / bias
        if need <= vmem_budget or (tm == 128 and tk == 128):
            return tm, tk
        if tk_cap > 128:
            tk_cap //= 2
        else:
            tm_cap //= 2


def _graphconv_kernel(a_ref, h_ref, w_ref, b_ref, o_ref, acc_ref, *, apply_relu):
    """One GraphConv layer: out[i-tile] = act((sum_k A[i,k] @ H[k]) @ W + b)."""
    k = pl.program_id(1)

    @pl.when(k == 0)
    def _():
        acc_ref[...] = jnp.zeros_like(acc_ref)

    # Dominant matmul: streamed bf16 A tile x bf16 H tile, f32 accumulation.
    acc_ref[...] += jnp.dot(a_ref[...], h_ref[...],
                            preferred_element_type=jnp.float32)

    @pl.when(k == pl.num_programs(1) - 1)
    def _():
        agg = acc_ref[...].astype(jnp.bfloat16)       # bf16 MXU path for W dot
        z = jnp.dot(agg, w_ref[...], preferred_element_type=jnp.float32)
        z = z + b_ref[...]                            # (tm,F) + (1,F) broadcast
        if apply_relu:
            z = jnp.maximum(z, 0.0)
        o_ref[...] = z.astype(o_ref.dtype)


def _graphconv_layer(a_pad, h_pad, w_pad, b_pad, *, apply_relu, out_dtype,
                     tm, tk, vmem_limit):
    np_ = a_pad.shape[0]
    f_in = h_pad.shape[1]
    f_out = w_pad.shape[1]
    grid = (np_ // tm, np_ // tk)

    out_itemsize = jnp.dtype(out_dtype).itemsize
    cost = pl.CostEstimate(
        flops=2 * np_ * np_ * f_in + 2 * np_ * f_in * f_out,
        transcendentals=0,
        bytes_accessed=(a_pad.size * 2 + h_pad.size * 2 + w_pad.size * 2
                        + b_pad.size * 4 + np_ * f_out * out_itemsize))

    kernel = functools.partial(_graphconv_kernel, apply_relu=apply_relu)
    return pl.pallas_call(
        kernel,
        out_shape=jax.ShapeDtypeStruct((np_, f_out), out_dtype),
        grid_spec=pltpu.PrefetchScalarGridSpec(
            num_scalar_prefetch=0,
            grid=grid,
            in_specs=[
                pl.BlockSpec((tm, tk), lambda i, k: (i, k)),       # A (streamed)
                pl.BlockSpec((tk, f_in), lambda i, k: (k, 0)),     # H rows for k
                pl.BlockSpec((f_in, f_out), lambda i, k: (0, 0)),  # W (resident)
                pl.BlockSpec((1, f_out), lambda i, k: (0, 0)),     # bias
            ],
            out_specs=pl.BlockSpec((tm, f_out), lambda i, k: (i, 0)),
            scratch_shapes=[pltpu.VMEM((tm, f_in), jnp.float32)],
        ),
        compiler_params=pltpu.CompilerParams(
            dimension_semantics=("parallel", "arbitrary"),
            vmem_limit_bytes=int(vmem_limit)),
        cost_estimate=cost,
    )(a_pad, h_pad, w_pad, b_pad)


def prepare_inputs(a_hat, features, params):
    """Hoisted, once-per-graph bf16 casting + lane/sublane zero padding."""
    n = features.shape[0]
    np_ = _round_up(n, LANE)
    f_in = _round_up(features.shape[1], LANE)

    a_pad = jnp.zeros((np_, np_), jnp.bfloat16)
    a_pad = a_pad.at[:n, :n].set(a_hat.astype(jnp.bfloat16))

    h0 = jnp.zeros((np_, f_in), jnp.bfloat16)
    h0 = h0.at[:n, : features.shape[1]].set(features.astype(jnp.bfloat16))

    padded_params = []
    prev = f_in
    for (w, b) in params:
        f_out = _round_up(w.shape[1], LANE)
        wp = jnp.zeros((prev, f_out), jnp.bfloat16)
        wp = wp.at[: w.shape[0], : w.shape[1]].set(w.astype(jnp.bfloat16))
        bp = jnp.zeros((1, f_out), jnp.float32)
        bp = bp.at[:, : b.shape[1]].set(b)
        padded_params.append((wp, bp))
        prev = f_out
    return a_pad, h0, padded_params


def gcn_forward(a_pad, h0_pad, padded_params, n_nodes, n_classes):
    """Full GCN forward: one row/K-tiled pallas_call per GraphConv layer."""
    np_ = a_pad.shape[0]
    capacity = _vmem_capacity_bytes()
    vmem_limit = min(capacity // 2, 128 << 20)   # headroom on every generation
    tile_budget = (capacity * 2) // 5            # ~40% of VMEM for our buffers

    h = h0_pad
    n_layers = len(padded_params)
    for i, (w, b) in enumerate(padded_params):
        last = (i == n_layers - 1)
        tm, tk = _choose_tiles(np_, h.shape[1], w.shape[1], tile_budget)
        h = _graphconv_layer(
            a_pad, h, w, b,
            apply_relu=not last,
            out_dtype=jnp.float32 if last else jnp.bfloat16,
            tm=tm, tk=tk, vmem_limit=vmem_limit)
        # TODO(synk): nn.Dropout(p=0.5) between layers is identity at
        # inference; a training-mode variant would mask `h` here using
        # pltpu.prng_seed / pltpu.prng_random_bits.

    # Slice padded rows / class columns back to the true extents.
    return h[:n_nodes, :n_classes]


def build_normalized_adjacency(key, n):
    """Random symmetric graph + self-loops, then D^{-1/2} A D^{-1/2}."""
    probs = jax.random.uniform(key, (n, n))
    adj = (probs < 0.1).astype(jnp.float32)
    adj = jnp.maximum(adj, adj.T)                            # symmetric
    adj = jnp.maximum(adj, jnp.eye(n, dtype=jnp.float32))    # self-loops
    deg = jnp.sum(adj, axis=1)
    d_inv_sqrt = 1.0 / jnp.sqrt(jnp.maximum(deg, 1.0))
    return adj * d_inv_sqrt[:, None] * d_inv_sqrt[None, :]


def init_params(key, in_feats, n_hidden, n_classes, n_layers):
    """GraphConv-shaped weights: [in,hid], [hid,hid]*, [hid,cls]; zero bias."""
    dims = [in_feats] + [n_hidden] * (n_layers - 1) + [n_classes]
    params = []
    for i in range(n_layers):
        key, wk = jax.random.split(key)
        fan_in, fan_out = dims[i], dims[i + 1]
        scale = jnp.sqrt(6.0 / (fan_in + fan_out))           # xavier-uniform-like
        w = jax.random.uniform(wk, (fan_in, fan_out), minval=-scale, maxval=scale,
                               dtype=jnp.float32)
        b = jnp.zeros((1, fan_out), dtype=jnp.float32)
        params.append((w, b))
    return params


def _ref_forward(a_hat, features, params):
    """Pure-JAX reference with the same bf16 input quantization, f32 math."""
    a = a_hat.astype(jnp.bfloat16).astype(jnp.float32)
    h = features.astype(jnp.bfloat16).astype(jnp.float32)
    n_layers = len(params)
    for i, (w, b) in enumerate(params):
        w32 = w.astype(jnp.bfloat16).astype(jnp.float32)
        z = (a @ h) @ w32 + b
        if i != n_layers - 1:
            h = jnp.maximum(z, 0.0).astype(jnp.bfloat16).astype(jnp.float32)
        else:
            h = z
    return h


if __name__ == "__main__":
    # Small synthetic problem consistent with the module.
    N_NODES = 64
    IN_FEATS = 16
    N_HIDDEN = 32
    N_CLASSES = 8
    N_LAYERS = 3

    key = jax.random.PRNGKey(0)
    k_adj, k_feat, k_param = jax.random.split(key, 3)

    a_hat = build_normalized_adjacency(k_adj, N_NODES)
    features = jax.random.normal(k_feat, (N_NODES, IN_FEATS), dtype=jnp.float32)
    params = init_params(k_param, IN_FEATS, N_HIDDEN, N_CLASSES, N_LAYERS)

    # Hoisted once-per-graph preparation (bf16 cast + lane-dense padding).
    a_pad, h0_pad, padded_params = prepare_inputs(a_hat, features, params)

    out = gcn_forward(a_pad, h0_pad, padded_params, N_NODES, N_CLASSES)
    out = jax.block_until_ready(out)

    assert out.shape == (N_NODES, N_CLASSES)
    assert out.dtype == jnp.float32

    ref = _ref_forward(a_hat, features, params)
    max_err = float(jnp.max(jnp.abs(out - ref)))
    assert jnp.allclose(out, ref, atol=1e-1, rtol=1e-1), max_err

    print("KERNEL_OK")
</pallas_src>

<mosaic_0001>
module attributes {stable_mosaic.version = 11 : i64} {
  func.func @_graphconv_kernel(%arg0: i32, %arg1: i32, %arg2: memref<128x128xbf16, #tpu.memory_space<vmem>>, %arg3: memref<128x128xbf16, #tpu.memory_space<vmem>>, %arg4: memref<128x128xbf16, #tpu.memory_space<vmem>>, %arg5: memref<1x128xf32, #tpu.memory_space<vmem>>, %arg6: memref<128x128xbf16, #tpu.memory_space<vmem>>, %arg7: memref<128x128xf32, #tpu.memory_space<vmem>>) attributes {dimension_semantics = [#tpu.dimension_semantics<parallel>, #tpu.dimension_semantics<arbitrary>], iteration_bounds = array<i64: 1, 1>, scalar_prefetch = 0 : i64, scratch_operands = 1 : i64, tpu.core_type = #tpu.core_type<tc>, window_params = [{transform_indices = @transform_0, window_bounds = array<i64: 128, 128>}, {transform_indices = @transform_1, window_bounds = array<i64: 128, 128>}, {pipeline_mode = #tpu.pipeline_mode<synchronous>, transform_indices = @transform_2, window_bounds = array<i64: 128, 128>}, {pipeline_mode = #tpu.pipeline_mode<synchronous>, transform_indices = @transform_3, window_bounds = array<i64: 1, 128>}, {transform_indices = @transform_4, window_bounds = array<i64: 128, 128>}]} {
    %c0_i32 = arith.constant 0 : i32
    %0 = arith.cmpi eq, %arg1, %c0_i32 : i32
    %1 = arith.extui %0 : i1 to i32
    %c0_i32_0 = arith.constant 0 : i32
    %2 = arith.cmpi ne, %1, %c0_i32_0 : i32
    scf.if %2 {
      %cst_10 = arith.constant 0.000000e+00 : f32
      %12 = vector.broadcast %cst_10 : f32 to vector<128x128xf32>
      %c0_11 = arith.constant 0 : index
      %c0_12 = arith.constant 0 : index
      %13 = vector.load %arg7[%c0_11, %c0_12] : memref<128x128xf32, #tpu.memory_space<vmem>>, vector<128x128xf32>
      tpu.vector_store %arg7[%c0_11, %c0_12], %12 {strides = array<i32>} : memref<128x128xf32, #tpu.memory_space<vmem>>, vector<128x128xf32>,
    } else {
    }
    %c0 = arith.constant 0 : index
    %c0_1 = arith.constant 0 : index
    %3 = vector.load %arg7[%c0, %c0_1] : memref<128x128xf32, #tpu.memory_space<vmem>>, vector<128x128xf32>
    %c0_2 = arith.constant 0 : index
    %c0_3 = arith.constant 0 : index
    %4 = vector.load %arg2[%c0_2, %c0_3] : memref<128x128xbf16, #tpu.memory_space<vmem>>, vector<128x128xbf16>
    %c0_4 = arith.constant 0 : index
    %c0_5 = arith.constant 0 : index
    %5 = vector.load %arg3[%c0_4, %c0_5] : memref<128x128xbf16, #tpu.memory_space<vmem>>, vector<128x128xbf16>
    %cst = arith.constant dense<0.000000e+00> : vector<128x128xf32>
    %6 = tpu.matmul %4, %5, %cst {dimension_numbers = #tpu.dot_dimension_numbers<[1], [0], [0], [1], [0, 0, 1, 1], [], []>} : vector<128x128xbf16>, vector<128x128xbf16>, vector<128x128xf32> -> vector<128x128xf32>
    %7 = arith.addf %3, %6 : vector<128x128xf32>
    %c0_6 = arith.constant 0 : index
    %c0_7 = arith.constant 0 : index
    %8 = vector.load %arg7[%c0_6, %c0_7] : memref<128x128xf32, #tpu.memory_space<vmem>>, vector<128x128xf32>
    tpu.vector_store %arg7[%c0_6, %c0_7], %7 {strides = array<i32>} : memref<128x128xf32, #tpu.memory_space<vmem>>, vector<128x128xf32>,
    %c0_i32_8 = arith.constant 0 : i32
    %9 = arith.cmpi eq, %arg1, %c0_i32_8 : i32
    %10 = arith.extui %9 : i1 to i32
    %c0_i32_9 = arith.constant 0 : i32
    %11 = arith.cmpi ne, %10, %c0_i32_9 : i32
    scf.if %11 {
      %c0_10 = arith.constant 0 : index
      %c0_11 = arith.constant 0 : index
      %12 = vector.load %arg7[%c0_10, %c0_11] : memref<128x128xf32, #tpu.memory_space<vmem>>, vector<128x128xf32>
      %13 = arith.truncf %12 : vector<128x128xf32> to vector<128x128xbf16>
      %c0_12 = arith.constant 0 : index
      %c0_13 = arith.constant 0 : index
      %14 = vector.load %arg4[%c0_12, %c0_13] : memref<128x128xbf16, #tpu.memory_space<vmem>>, vector<128x128xbf16>
      %cst_14 = arith.constant dense<0.000000e+00> : vector<128x128xf32>
      %15 = tpu.matmul %13, %14, %cst_14 {dimension_numbers = #tpu.dot_dimension_numbers<[1], [0], [0], [1], [0, 0, 1, 1], [], []>} : vector<128x128xbf16>, vector<128x128xbf16>, vector<128x128xf32> -> vector<128x128xf32>
      %c0_15 = arith.constant 0 : index
      %c0_16 = arith.constant 0 : index
      %16 = vector.load %arg5[%c0_15, %c0_16] : memref<1x128xf32, #tpu.memory_space<vmem>>, vector<1x128xf32>
      %17 = vector.broadcast %16 : vector<1x128xf32> to vector<128x128xf32>
      %18 = arith.addf %15, %17 : vector<128x128xf32>
      %cst_17 = arith.constant 0.000000e+00 : f32
      %19 = vector.broadcast %cst_17 : f32 to vector<128x128xf32>
      %20 = arith.maximumf %18, %19 : vector<128x128xf32>
      %21 = arith.truncf %20 : vector<128x128xf32> to vector<128x128xbf16>
      %c0_18 = arith.constant 0 : index
      %c0_19 = arith.constant 0 : index
      %22 = vector.load %arg6[%c0_18, %c0_19] : memref<128x128xbf16, #tpu.memory_space<vmem>>, vector<128x128xbf16>
      tpu.vector_store %arg6[%c0_18, %c0_19], %21 {strides = array<i32>} : memref<128x128xbf16, #tpu.memory_space<vmem>>, vector<128x128xbf16>,
    } else {
    }
    return
  }
  func.func @transform_0(%arg0: i32, %arg1: i32) -> (i32, i32) {
    %c0_i32 = arith.constant 0 : i32
    return %arg0, %arg1 : i32, i32
  }
  func.func @transform_1(%arg0: i32, %arg1: i32) -> (i32, i32) {
    %c0_i32 = arith.constant 0 : i32
    %c0_i32_0 = arith.constant 0 : i32
    return %arg1, %c0_i32 : i32, i32
  }
  func.func @transform_2(%arg0: i32, %arg1: i32) -> (i32, i32) {
    %c0_i32 = arith.constant 0 : i32
    %c0_i32_0 = arith.constant 0 : i32
    %c0_i32_1 = arith.constant 0 : i32
    return %c0_i32, %c0_i32_0 : i32, i32
  }
  func.func @transform_3(%arg0: i32, %arg1: i32) -> (i32, i32) {
    %c0_i32 = arith.constant 0 : i32
    %c0_i32_0 = arith.constant 0 : i32
    %c0_i32_1 = arith.constant 0 : i32
    return %c0_i32, %c0_i32_0 : i32, i32
  }
  func.func @transform_4(%arg0: i32, %arg1: i32) -> (i32, i32) {
    %c0_i32 = arith.constant 0 : i32
    %c0_i32_0 = arith.constant 0 : i32
    return %arg0, %c0_i32 : i32, i32
  }
}

</mosaic_0001>

<llo_original>
// kernel: tpu_custom_call.1
$region0: #{tpu_custom_call.1}
  #allocation0 [shape = 'u32[]', space=smem, size = 0x4, offset = 0x4, fixed_abs, tag = 'smem constant byte address 0x4 - core index']
  #allocation1 [shape = 'u32[72,128]{1,0:T(1,128)}', space=vmem, size = 0x9000, scoped, tag = 'internal scratch']
  #allocation2 [shape = 'f32[128,128]{1,0:T(8,128)}', space=vmem, size = 0x10000, scoped, tag = 'scratch operand']
  %s0 = inlined_call_operand.hbm [shape: bf16[128,128], index: 0, kind: input, shape index: {}]
  %s1 = inlined_call_operand.hbm [shape: bf16[128,128], index: 1, kind: input, shape index: {}]
  %s2 = inlined_call_operand.hbm [shape: bf16[128,128], index: 2, kind: input, shape index: {}]
  %s3 = inlined_call_operand.vmem [shape: f32[1,128], index: 3, kind: input, shape index: {}]
  %s4 = inlined_call_operand.hbm [shape: bf16[128,128], index: 4, kind: output, shape index: {}]
  %s5 = sld [smem:[#allocation0]]
  $region46: #{tpu_custom_call.1} parent=0
    _
  %s7 = ssub.s32 1, %s5
  %s8 = scalar_select 0, %s7, %s5
  $region1: #{tpu_custom_call.1} parent=0
    #allocation3 [shape = 'u8[32768]{0}', space=vmem, size = 0x8000, scoped, tag = 'input window, operand 0, single buffered']
    #allocation4 [shape = 's32[1]{0}', space=sflag, size = 0x4, scoped, tag = 'scoped memory for tpu_custom_call.1']
    #allocation5 [shape = 's32[1]{0}', space=sflag, size = 0x4, scoped, tag = 'scoped memory for tpu_custom_call.1']
    #allocation6 [shape = 'u8[32768]{0}', space=vmem, size = 0x8000, scoped, tag = 'input window, operand 1, single buffered']
    #allocation7 [shape = 's32[1]{0}', space=sflag, size = 0x4, scoped, tag = 'scoped memory for tpu_custom_call.1']
    #allocation8 [shape = 'u8[32768]{0}', space=vmem, size = 0x8000, scoped, tag = 'input window, operand 2, single buffered']
    #allocation9 [shape = 'u8[32768]{0}', space=vmem, size = 0x8000, scoped, tag = 'output window, operand 0, single buffered']
    %9 = vsyncpa [#allocation4], 0
    %10 = vsyncpa [#allocation7], 0
    %11 = vsyncpa [#allocation5], 0
    // Predicated region
    $region2: #{tpu_custom_call.1} parent=1 // pred_check
      _
    $region3: #{tpu_custom_call.1} parent=1 // pred_check_branch
      %13 = sbr.rel (0) target = $region5
    $region4: #{tpu_custom_call.1} parent=1 // pred_region
      %15 = vsyncadd [#allocation4], 0
      %s16 = sshll.u32 %s0, 4
      %s17 = int_to_ptr.hbm [resolvable:$true] %s16
      %s18 = sshll.u32 [#allocation3], 4
      %s19 = int_to_ptr.vmem [resolvable:$true] %s18
      %24 = dma.hbm_to_vmem [thread:$0]  %s17, 1024, %s19, [#allocation4], 64, 64, 4
    $region5: #{tpu_custom_call.1} parent=1 // pred_fallthru
      _
    // Predicated region
    $region6: #{tpu_custom_call.1} parent=1 // pred_check
      _
    $region7: #{tpu_custom_call.1} parent=1 // pred_check_branch
      %26 = sbr.rel (0) target = $region9
    $region8: #{tpu_custom_call.1} parent=1 // pred_region
      %28 = vsyncadd [#allocation7], 0
      %s29 = sshll.u32 %s1, 4
      %s30 = int_to_ptr.hbm [resolvable:$true] %s29
      %s31 = sshll.u32 [#allocation6], 4
      %s32 = int_to_ptr.vmem [resolvable:$true] %s31
      %37 = dma.hbm_to_vmem [thread:$0]  %s30, 1024, %s32, [#allocation7], 64, 64, 4
    $region9: #{tpu_custom_call.1} parent=1 // pred_fallthru
      _
    // Predicated region
    $region10: #{tpu_custom_call.1} parent=1 // pred_check
      _
    $region11: #{tpu_custom_call.1} parent=1 // pred_check_branch
      %39 = sbr.rel (0) target = $region13
    $region12: #{tpu_custom_call.1} parent=1 // pred_region
      %41 = vsyncadd [#allocation7], 0
      %s42 = sshll.u32 %s2, 4
      %s43 = int_to_ptr.hbm [resolvable:$true] %s42
      %s44 = sshll.u32 [#allocation8], 4
      %s45 = int_to_ptr.vmem [resolvable:$true] %s44
      %50 = dma.hbm_to_vmem [thread:$0]  %s43, 1024, %s45, [#allocation7], 64, 64, 4
    $region13: #{tpu_custom_call.1} parent=1 // pred_fallthru
      _
    // Predicated region
    $region14: #{tpu_custom_call.1} parent=1 // pred_check
      _
    $region15: #{tpu_custom_call.1} parent=1 // pred_check_branch
      %52 = sbr.rel (0) target = $region17
    $region16: #{tpu_custom_call.1} parent=1 // pred_region
      _
    $region17: #{tpu_custom_call.1} parent=1 // pred_fallthru
      _
    // Predicated region
    $region18: #{tpu_custom_call.1} parent=1 // pred_check
      _
    $region19: #{tpu_custom_call.1} parent=1 // pred_check_branch
      %54 = sbr.rel (0) target = $region21
    $region20: #{tpu_custom_call.1} parent=1 // pred_region
      %56 = dma.done [#allocation4], 1024
    $region21: #{tpu_custom_call.1} parent=1 // pred_fallthru
      _
    // Predicated region
    $region22: #{tpu_custom_call.1} parent=1 // pred_check
      _
    $region23: #{tpu_custom_call.1} parent=1 // pred_check_branch
      %58 = sbr.rel (0) target = $region25
    $region24: #{tpu_custom_call.1} parent=1 // pred_region
      %60 = dma.done [#allocation7], 1024
    $region25: #{tpu_custom_call.1} parent=1 // pred_fallthru
      _
    // Predicated region
    $region26: #{tpu_custom_call.1} parent=1 // pred_check
      _
    $region27: #{tpu_custom_call.1} parent=1 // pred_check_branch
      %62 = sbr.rel (0) target = $region29
    $region28: #{tpu_custom_call.1} parent=1 // pred_region
      %64 = dma.done [#allocation7], 1024
    $region29: #{tpu_custom_call.1} parent=1 // pred_fallthru
      _
    %p65 = scmp.eq.s32.totalorder 0, 0
    // Predicated region
    $region30: #{tpu_custom_call.1} parent=1 // pred_check
      %p66 = pneg %p65
    $region31: #{tpu_custom_call.1} parent=1 // pred_check_branch
      %68 = sbr.rel (%p66) target = $region33
    $region32: #{tpu_custom_call.1} parent=1 // pred_region
      %69 = vst [vmem:[#allocation2] sm:$0xff] 0.0
      %70 = vst [vmem:[#allocation2 + $0x8] sm:$0xff] 0.0
      %71 = vst [vmem:[#allocation2 + $0x10] sm:$0xff] 0.0
      %72 = vst [vmem:[#allocation2 + $0x18] sm:$0xff] 0.0
      %73 = vst [vmem:[#allocation2 + $0x20] sm:$0xff] 0.0
      %74 = vst [vmem:[#allocation2 + $0x28] sm:$0xff] 0.0
      %75 = vst [vmem:[#allocation2 + $0x30] sm:$0xff] 0.0
      %76 = vst [vmem:[#allocation2 + $0x38] sm:$0xff] 0.0
      %77 = vst [vmem:[#allocation2 + $0x40] sm:$0xff] 0.0
      %78 = vst [vmem:[#allocation2 + $0x48] sm:$0xff] 0.0
      %79 = vst [vmem:[#allocation2 + $0x50] sm:$0xff] 0.0
      %80 = vst [vmem:[#allocation2 + $0x58] sm:$0xff] 0.0
      %81 = vst [vmem:[#allocation2 + $0x60] sm:$0xff] 0.0
      %82 = vst [vmem:[#allocation2 + $0x68] sm:$0xff] 0.0
      %83 = vst [vmem:[#allocation2 + $0x70] sm:$0xff] 0.0
      %84 = vst [vmem:[#allocation2 + $0x78] sm:$0xff] 0.0
    $region33: #{tpu_custom_call.1} parent=1 // pred_fallthru
      _
    %v85 = vld [vmem:[#allocation2] sm:$0xff]
    %v86 = vld [vmem:[#allocation2 + $0x8] sm:$0xff]
    %v87 = vld [vmem:[#allocation2 + $0x10] sm:$0xff]
    %v88 = vld [vmem:[#allocation2 + $0x18] sm:$0xff]
    %v89 = vld [vmem:[#allocation2 + $0x20] sm:$0xff]
    %v90 = vld [vmem:[#allocation2 + $0x28] sm:$0xff]
    %v91 = vld [vmem:[#allocation2 + $0x30] sm:$0xff]
    %v92 = vld [vmem:[#allocation2 + $0x38] sm:$0xff]
    %v93 = vld [vmem:[#allocation2 + $0x40] sm:$0xff]
    %v94 = vld [vmem:[#allocation2 + $0x48] sm:$0xff]
    %v95 = vld [vmem:[#allocation2 + $0x50] sm:$0xff]
    %v96 = vld [vmem:[#allocation2 + $0x58] sm:$0xff]
    %v97 = vld [vmem:[#allocation2 + $0x60] sm:$0xff]
    %v98 = vld [vmem:[#allocation2 + $0x68] sm:$0xff]
    %v99 = vld [vmem:[#allocation2 + $0x70] sm:$0xff]
    %v100 = vld [vmem:[#allocation2 + $0x78] sm:$0xff]
    %v101 = vld [vmem:[#allocation3] sm:$0xf]
    %v102 = vld [vmem:[#allocation3 + $0x4] sm:$0xf]
    %v103 = vld [vmem:[#allocation3 + $0x8] sm:$0xf]
    %v104 = vld [vmem:[#allocation3 + $0xc] sm:$0xf]
    %v105 = vld [vmem:[#allocation3 + $0x10] sm:$0xf]
    %v106 = vld [vmem:[#allocation3 + $0x14] sm:$0xf]
    %v107 = vld [vmem:[#allocation3 + $0x18] sm:$0xf]
    %v108 = vld [vmem:[#allocation3 + $0x1c] sm:$0xf]
    %v109 = vld [vmem:[#allocation3 + $0x20] sm:$0xf]
    %v110 = vld [vmem:[#allocation3 + $0x24] sm:$0xf]
    %v111 = vld [vmem:[#allocation3 + $0x28] sm:$0xf]
    %v112 = vld [vmem:[#allocation3 + $0x2c] sm:$0xf]
    %v113 = vld [vmem:[#allocation3 + $0x30] sm:$0xf]
    %v114 = vld [vmem:[#allocation3 + $0x34] sm:$0xf]
    %v115 = vld [vmem:[#allocation3 + $0x38] sm:$0xf]
    %v116 = vld [vmem:[#allocation3 + $0x3c] sm:$0xf]
    %v117 = vld [vmem:[#allocation6] sm:$0xf]
    %v118 = vld [vmem:[#allocation6 + $0x4] sm:$0xf]
    %v119 = vld [vmem:[#allocation6 + $0x8] sm:$0xf]
    %v120 = vld [vmem:[#allocation6 + $0xc] sm:$0xf]
    %v121 = vld [vmem:[#allocation6 + $0x10] sm:$0xf]
    %v122 = vld [vmem:[#allocation6 + $0x14] sm:$0xf]
    %v123 = vld [vmem:[#allocation6 + $0x18] sm:$0xf]
    %v124 = vld [vmem:[#allocation6 + $0x1c] sm:$0xf]
    %v125 = vld [vmem:[#allocation6 + $0x20] sm:$0xf]
    %v126 = vld [vmem:[#allocation6 + $0x24] sm:$0xf]
    %v127 = vld [vmem:[#allocation6 + $0x28] sm:$0xf]
    %v128 = vld [vmem:[#allocation6 + $0x2c] sm:$0xf]
    %v129 = vld [vmem:[#allocation6 + $0x30] sm:$0xf]
    %v130 = vld [vmem:[#allocation6 + $0x34] sm:$0xf]
    %v131 = vld [vmem:[#allocation6 + $0x38] sm:$0xf]
    %v132 = vld [vmem:[#allocation6 + $0x3c] sm:$0xf]
    %v149 = vunpack.c.l.b16 %v101
    %v150 = vunpack.c.l.b16 %v102
    %v151 = vunpack.c.l.b16 %v103
    %v152 = vunpack.c.l.b16 %v104
    %v153 = vunpack.c.l.b16 %v105
    %v154 = vunpack.c.l.b16 %v106
    %v155 = vunpack.c.l.b16 %v107
    %v156 = vunpack.c.l.b16 %v108
    %v157 = vunpack.c.l.b16 %v109
    %v158 = vunpack.c.l.b16 %v110
    %v159 = vunpack.c.l.b16 %v111
    %v160 = vunpack.c.l.b16 %v112
    %v161 = vunpack.c.l.b16 %v113
    %v162 = vunpack.c.l.b16 %v114
    %v163 = vunpack.c.l.b16 %v115
    %v164 = vunpack.c.l.b16 %v116
    %v165 = vpack.c.b16 %v150, %v149
    %v166 = vpack.c.b16 %v152, %v151
    %v167 = vpack.c.b16 %v154, %v153
    %v168 = vpack.c.b16 %v156, %v155
    %v169 = vpack.c.b16 %v158, %v157
    %v170 = vpack.c.b16 %v160, %v159
    %v171 = vpack.c.b16 %v162, %v161
    %v172 = vpack.c.b16 %v164, %v163
    %v197 = vunpack.c.l.b16 %v117
    %v198 = vunpack.c.l.b16 %v118
    %v199 = vunpack.c.l.b16 %v119
    %v200 = vunpack.c.l.b16 %v120
    %v201 = vunpack.c.l.b16 %v121
    %v202 = vunpack.c.l.b16 %v122
    %v203 = vunpack.c.l.b16 %v123
    %v204 = vunpack.c.l.b16 %v124
    %v205 = vunpack.c.l.b16 %v125
    %v206 = vunpack.c.l.b16 %v126
    %v207 = vunpack.c.l.b16 %v127
    %v208 = vunpack.c.l.b16 %v128
    %v209 = vunpack.c.l.b16 %v129
    %v210 = vunpack.c.l.b16 %v130
    %v211 = vunpack.c.l.b16 %v131
    %v212 = vunpack.c.l.b16 %v132
    %v213 = vpack.c.b16 %v198, %v197
    %v214 = vpack.c.b16 %v200, %v199
    %v215 = vpack.c.b16 %v202, %v201
    %v216 = vpack.c.b16 %v204, %v203
    %v217 = vpack.c.b16 %v206, %v205
    %v218 = vpack.c.b16 %v208, %v207
    %v219 = vpack.c.b16 %v210, %v209
    %v220 = vpack.c.b16 %v212, %v211
    %229 = vmatpush.bf16.msra.mxu0 %v220
    %230 = vmatpush.bf16.msra.mxu0 %v219
    %231 = vmatpush.bf16.msra.mxu0 %v218
    %232 = vmatpush.bf16.msra.mxu0 %v217
    %233 = vmatpush.bf16.msra.mxu0 %v216
    %234 = vmatpush.bf16.msra.mxu0 %v215
    %235 = vmatpush.bf16.msra.mxu0 %v214
    %236 = vmatpush.bf16.msra.mxu0 %v213
    %237 = vmatmul.bf16.gmra.mxu0 %v165
    %v238 = vpop.f32.mrf.mxu0
    %v239 = vadd.f32 0.0, %v238
    %v240 = vpop.f32.mrf.mxu0
    %v241 = vadd.f32 0.0, %v240
    %242 = vmatmul.bf16.gmra.mxu0 %v166
    %v243 = vpop.f32.mrf.mxu0
    %v244 = vadd.f32 0.0, %v243
    %v245 = vpop.f32.mrf.mxu0
    %v246 = vadd.f32 0.0, %v245
    %247 = vmatmul.bf16.gmra.mxu0 %v167
    %v248 = vpop.f32.mrf.mxu0
    %v249 = vadd.f32 0.0, %v248
    %v250 = vpop.f32.mrf.mxu0
    %v251 = vadd.f32 0.0, %v250
    %252 = vmatmul.bf16.gmra.mxu0 %v168
    %v253 = vpop.f32.mrf.mxu0
    %v254 = vadd.f32 0.0, %v253
    %v255 = vpop.f32.mrf.mxu0
    %v256 = vadd.f32 0.0, %v255
    %257 = vmatmul.bf16.gmra.mxu0 %v169
    %v258 = vpop.f32.mrf.mxu0
    %v259 = vadd.f32 0.0, %v258
    %v260 = vpop.f32.mrf.mxu0
    %v261 = vadd.f32 0.0, %v260
    %262 = vmatmul.bf16.gmra.mxu0 %v170
    %v263 = vpop.f32.mrf.mxu0
    %v264 = vadd.f32 0.0, %v263
    %v265 = vpop.f32.mrf.mxu0
    %v266 = vadd.f32 0.0, %v265
    %267 = vmatmul.bf16.gmra.mxu0 %v171
    %v268 = vpop.f32.mrf.mxu0
    %v269 = vadd.f32 0.0, %v268
    %v270 = vpop.f32.mrf.mxu0
    %v271 = vadd.f32 0.0, %v270
    %272 = vmatmul.bf16.gmra.mxu0 %v172
    %v273 = vpop.f32.mrf.mxu0
    %v274 = vadd.f32 0.0, %v273
    %v275 = vpop.f32.mrf.mxu0
    %v276 = vadd.f32 0.0, %v275
    %277 = vdwg.mxu0
    %v278 = vadd.f32 %v85, %v239
    %v279 = vadd.f32 %v86, %v241
    %v280 = vadd.f32 %v87, %v244
    %v281 = vadd.f32 %v88, %v246
    %v282 = vadd.f32 %v89, %v249
    %v283 = vadd.f32 %v90, %v251
    %v284 = vadd.f32 %v91, %v254
    %v285 = vadd.f32 %v92, %v256
    %v286 = vadd.f32 %v93, %v259
    %v287 = vadd.f32 %v94, %v261
    %v288 = vadd.f32 %v95, %v264
    %v289 = vadd.f32 %v96, %v266
    %v290 = vadd.f32 %v97, %v269
    %v291 = vadd.f32 %v98, %v271
    %v292 = vadd.f32 %v99, %v274
    %v293 = vadd.f32 %v100, %v276
    %294 = vst [vmem:[#allocation2] sm:$0xff] %v278
    %295 = vst [vmem:[#allocation2 + $0x8] sm:$0xff] %v279
    %296 = vst [vmem:[#allocation2 + $0x10] sm:$0xff] %v280
    %297 = vst [vmem:[#allocation2 + $0x18] sm:$0xff] %v281
    %298 = vst [vmem:[#allocation2 + $0x20] sm:$0xff] %v282
    %299 = vst [vmem:[#allocation2 + $0x28] sm:$0xff] %v283
    %300 = vst [vmem:[#allocation2 + $0x30] sm:$0xff] %v284
    %301 = vst [vmem:[#allocation2 + $0x38] sm:$0xff] %v285
    %302 = vst [vmem:[#allocation2 + $0x40] sm:$0xff] %v286
    %303 = vst [vmem:[#allocation2 + $0x48] sm:$0xff] %v287
    %304 = vst [vmem:[#allocation2 + $0x50] sm:$0xff] %v288
    %305 = vst [vmem:[#allocation2 + $0x58] sm:$0xff] %v289
    %306 = vst [vmem:[#allocation2 + $0x60] sm:$0xff] %v290
    %307 = vst [vmem:[#allocation2 + $0x68] sm:$0xff] %v291
    %308 = vst [vmem:[#allocation2 + $0x70] sm:$0xff] %v292
    %309 = vst [vmem:[#allocation2 + $0x78] sm:$0xff] %v293
    // Predicated region
    $region34: #{tpu_custom_call.1} parent=1 // pred_check
      %p310 = pneg %p65
    $region35: #{tpu_custom_call.1} parent=1 // pred_check_branch
      %312 = sbr.rel (%p310) target = $region37
    $region36: #{tpu_custom_call.1} parent=1 // pred_region
      %v313 = vld [vmem:[#allocation2] sm:$0xff]
      %v314 = vld [vmem:[#allocation2 + $0x8] sm:$0xff]
      %v315 = vld [vmem:[#allocation2 + $0x10] sm:$0xff]
      %v316 = vld [vmem:[#allocation2 + $0x18] sm:$0xff]
      %v317 = vld [vmem:[#allocation2 + $0x20] sm:$0xff]
      %v318 = vld [vmem:[#allocation2 + $0x28] sm:$0xff]
      %v319 = vld [vmem:[#allocation2 + $0x30] sm:$0xff]
      %v320 = vld [vmem:[#allocation2 + $0x38] sm:$0xff]
      %v321 = vld [vmem:[#allocation2 + $0x40] sm:$0xff]
      %v322 = vld [vmem:[#allocation2 + $0x48] sm:$0xff]
      %v323 = vld [vmem:[#allocation2 + $0x50] sm:$0xff]
      %v324 = vld [vmem:[#allocation2 + $0x58] sm:$0xff]
      %v325 = vld [vmem:[#allocation2 + $0x60] sm:$0xff]
      %v326 = vld [vmem:[#allocation2 + $0x68] sm:$0xff]
      %v327 = vld [vmem:[#allocation2 + $0x70] sm:$0xff]
      %v328 = vld [vmem:[#allocation2 + $0x78] sm:$0xff]
      %v329 = vpack.c.bf16 %v314, %v313
      %v330 = vpack.c.bf16 %v316, %v315
      %v331 = vpack.c.bf16 %v318, %v317
      %v332 = vpack.c.bf16 %v320, %v319
      %v333 = vpack.c.bf16 %v322, %v321
      %v334 = vpack.c.bf16 %v324, %v323
      %v335 = vpack.c.bf16 %v326, %v325
      %v336 = vpack.c.bf16 %v328, %v327
      %v337 = vld [vmem:[#allocation8] sm:$0xf]
      %v338 = vld [vmem:[#allocation8 + $0x4] sm:$0xf]
      %v339 = vld [vmem:[#allocation8 + $0x8] sm:$0xf]
      %v340 = vld [vmem:[#allocation8 + $0xc] sm:$0xf]
      %v341 = vld [vmem:[#allocation8 + $0x10] sm:$0xf]
      %v342 = vld [vmem:[#allocation8 + $0x14] sm:$0xf]
      %v343 = vld [vmem:[#allocation8 + $0x18] sm:$0xf]
      %v344 = vld [vmem:[#allocation8 + $0x1c] sm:$0xf]
      %v345 = vld [vmem:[#allocation8 + $0x20] sm:$0xf]
      %v346 = vld [vmem:[#allocation8 + $0x24] sm:$0xf]
      %v347 = vld [vmem:[#allocation8 + $0x28] sm:$0xf]
      %v348 = vld [vmem:[#allocation8 + $0x2c] sm:$0xf]
      %v349 = vld [vmem:[#allocation8 + $0x30] sm:$0xf]
      %v350 = vld [vmem:[#allocation8 + $0x34] sm:$0xf]
      %v351 = vld [vmem:[#allocation8 + $0x38] sm:$0xf]
      %v352 = vld [vmem:[#allocation8 + $0x3c] sm:$0xf]
      %v353 = vld [vmem:[%s3] sm:$0x1]
      %v355 = vperm.slane %v353, 0
      %v373 = vunpack.c.l.b16 %v337
      %v374 = vunpack.c.l.b16 %v338
      %v375 = vunpack.c.l.b16 %v339
      %v376 = vunpack.c.l.b16 %v340
      %v377 = vunpack.c.l.b16 %v341
      %v378 = vunpack.c.l.b16 %v342
      %v379 = vunpack.c.l.b16 %v343
      %v380 = vunpack.c.l.b16 %v344
      %v381 = vunpack.c.l.b16 %v345
      %v382 = vunpack.c.l.b16 %v346
      %v383 = vunpack.c.l.b16 %v347
      %v384 = vunpack.c.l.b16 %v348
      %v385 = vunpack.c.l.b16 %v349
      %v386 = vunpack.c.l.b16 %v350
      %v387 = vunpack.c.l.b16 %v351
      %v388 = vunpack.c.l.b16 %v352
      %v389 = vpack.c.b16 %v374, %v373
      %v390 = vpack.c.b16 %v376, %v375
      %v391 = vpack.c.b16 %v378, %v377
      %v392 = vpack.c.b16 %v380, %v379
      %v393 = vpack.c.b16 %v382, %v381
      %v394 = vpack.c.b16 %v384, %v383
      %v395 = vpack.c.b16 %v386, %v385
      %v396 = vpack.c.b16 %v388, %v387
      %405 = vmatpush.bf16.msra.mxu0 %v396
      %406 = vmatpush.bf16.msra.mxu0 %v395
      %407 = vmatpush.bf16.msra.mxu0 %v394
      %408 = vmatpush.bf16.msra.mxu0 %v393
      %409 = vmatpush.bf16.msra.mxu0 %v392
      %410 = vmatpush.bf16.msra.mxu0 %v391
      %411 = vmatpush.bf16.msra.mxu0 %v390
      %412 = vmatpush.bf16.msra.mxu0 %v389
      %413 = vmatmul.bf16.gmra.mxu0 %v329
      %v414 = vpop.f32.mrf.mxu0
      %v415 = vadd.f32 %v355, %v414
      %v416 = vpop.f32.mrf.mxu0
      %v417 = vadd.f32 %v355, %v416
      %418 = vmatmul.bf16.gmra.mxu0 %v330
      %v419 = vpop.f32.mrf.mxu0
      %v420 = vadd.f32 %v355, %v419
      %v421 = vpop.f32.mrf.mxu0
      %v422 = vadd.f32 %v355, %v421
      %423 = vmatmul.bf16.gmra.mxu0 %v331
      %v424 = vpop.f32.mrf.mxu0
      %v425 = vadd.f32 %v355, %v424
      %v426 = vpop.f32.mrf.mxu0
      %v427 = vadd.f32 %v355, %v426
      %428 = vmatmul.bf16.gmra.mxu0 %v332
      %v429 = vpop.f32.mrf.mxu0
      %v430 = vadd.f32 %v355, %v429
      %v431 = vpop.f32.mrf.mxu0
      %v432 = vadd.f32 %v355, %v431
      %433 = vmatmul.bf16.gmra.mxu0 %v333
      %v434 = vpop.f32.mrf.mxu0
      %v435 = vadd.f32 %v355, %v434
      %v436 = vpop.f32.mrf.mxu0
      %v437 = vadd.f32 %v355, %v436
      %438 = vmatmul.bf16.gmra.mxu0 %v334
      %v439 = vpop.f32.mrf.mxu0
      %v440 = vadd.f32 %v355, %v439
      %v441 = vpop.f32.mrf.mxu0
      %v442 = vadd.f32 %v355, %v441
      %443 = vmatmul.bf16.gmra.mxu0 %v335
      %v444 = vpop.f32.mrf.mxu0
      %v445 = vadd.f32 %v355, %v444
      %v446 = vpop.f32.mrf.mxu0
      %v447 = vadd.f32 %v355, %v446
      %448 = vmatmul.bf16.gmra.mxu0 %v336
      %v449 = vpop.f32.mrf.mxu0
      %v450 = vadd.f32 %v355, %v449
      %v451 = vpop.f32.mrf.mxu0
      %v452 = vadd.f32 %v355, %v451
      %453 = vdwg.mxu0
      %v454 = vmax.f32 %v415, 0.0
      %v455 = vmax.f32 %v417, 0.0
      %v456 = vmax.f32 %v420, 0.0
      %v457 = vmax.f32 %v422, 0.0
      %v458 = vmax.f32 %v425, 0.0
      %v459 = vmax.f32 %v427, 0.0
      %v460 = vmax.f32 %v430, 0.0
      %v461 = vmax.f32 %v432, 0.0
      %v462 = vmax.f32 %v435, 0.0
      %v463 = vmax.f32 %v437, 0.0
      %v464 = vmax.f32 %v440, 0.0
      %v465 = vmax.f32 %v442, 0.0
      %v466 = vmax.f32 %v445, 0.0
      %v467 = vmax.f32 %v447, 0.0
      %v468 = vmax.f32 %v450, 0.0
      %v469 = vmax.f32 %v452, 0.0
      %v470 = vpack.c.bf16 %v454, %v454
      %v471 = vpack.c.bf16 %v455, %v455
      %v472 = vpack.c.bf16 %v456, %v456
      %v473 = vpack.c.bf16 %v457, %v457
      %v474 = vpack.c.bf16 %v458, %v458
      %v475 = vpack.c.bf16 %v459, %v459
      %v476 = vpack.c.bf16 %v460, %v460
      %v477 = vpack.c.bf16 %v461, %v461
      %v478 = vpack.c.bf16 %v462, %v462
      %v479 = vpack.c.bf16 %v463, %v463
      %v480 = vpack.c.bf16 %v464, %v464
      %v481 = vpack.c.bf16 %v465, %v465
      %v482 = vpack.c.bf16 %v466, %v466
      %v483 = vpack.c.bf16 %v467, %v467
      %v484 = vpack.c.bf16 %v468, %v468
      %v485 = vpack.c.bf16 %v469, %v469
      %486 = vst [vmem:[#allocation9] sm:$0xf] %v470
      %487 = vst [vmem:[#allocation9 + $0x4] sm:$0xf] %v471
      %488 = vst [vmem:[#allocation9 + $0x8] sm:$0xf] %v472
      %489 = vst [vmem:[#allocation9 + $0xc] sm:$0xf] %v473
      %490 = vst [vmem:[#allocation9 + $0x10] sm:$0xf] %v474
      %491 = vst [vmem:[#allocation9 + $0x14] sm:$0xf] %v475
      %492 = vst [vmem:[#allocation9 + $0x18] sm:$0xf] %v476
      %493 = vst [vmem:[#allocation9 + $0x1c] sm:$0xf] %v477
      %494 = vst [vmem:[#allocation9 + $0x20] sm:$0xf] %v478
      %495 = vst [vmem:[#allocation9 + $0x24] sm:$0xf] %v479
      %496 = vst [vmem:[#allocation9 + $0x28] sm:$0xf] %v480
      %497 = vst [vmem:[#allocation9 + $0x2c] sm:$0xf] %v481
      %498 = vst [vmem:[#allocation9 + $0x30] sm:$0xf] %v482
      %499 = vst [vmem:[#allocation9 + $0x34] sm:$0xf] %v483
      %500 = vst [vmem:[#allocation9 + $0x38] sm:$0xf] %v484
      %501 = vst [vmem:[#allocation9 + $0x3c] sm:$0xf] %v485
    $region37: #{tpu_custom_call.1} parent=1 // pred_fallthru
      _
    // Predicated region
    $region38: #{tpu_custom_call.1} parent=1 // pred_check
      _
    $region39: #{tpu_custom_call.1} parent=1 // pred_check_branch
      %503 = sbr.rel (0) target = $region41
    $region40: #{tpu_custom_call.1} parent=1 // pred_region
      %505 = vsyncadd [#allocation5], 0
      %s506 = sshll.u32 [#allocation9], 4
      %s507 = int_to_ptr.vmem [resolvable:$true] %s506
      %s508 = sshll.u32 %s4, 4
      %s509 = int_to_ptr.hbm [resolvable:$true] %s508
      %514 = dma.vmem_to_hbm [thread:$0]  %s507, 1024, %s509, [#allocation5], 64, 64, 4
    $region41: #{tpu_custom_call.1} parent=1 // pred_fallthru
      _
    // Predicated region
    $region42: #{tpu_custom_call.1} parent=1 // pred_check
      _
    $region43: #{tpu_custom_call.1} parent=1 // pred_check_branch
      %516 = sbr.rel (0) target = $region45
    $region44: #{tpu_custom_call.1} parent=1 // pred_region
      %518 = dma.done [#allocation5], 1024
    $region45: #{tpu_custom_call.1} parent=1 // pred_fallthru
      _
    %519 = vsyncpa [#allocation4], 1
    %520 = vsyncpa [#allocation7], 1
    %521 = vsyncpa [#allocation5], 1

</llo_original>
